<compile_context>
chip_gen: v5e
topology: v5e:2x2
jax: 0.10.0
libtpu: 0.0.40
codegen_flags: <defaults>
</compile_context>

<pallas_src>
import functools
import math

import jax
import jax.numpy as jnp
from jax.experimental import pallas as pl
from jax.experimental.pallas import tpu as pltpu


def _round_up(x, m):
    return ((x + m - 1) // m) * m


def _vmem_limit_bytes():
    # ~3/4 of physical VMEM: 48 MiB on v7x (64 MiB/TC), ~96 MiB on v5e/v6e (128 MiB).
    try:
        cap = getattr(pltpu.get_tpu_info(), "vmem_capacity_bytes", None)
        if cap:
            return int(min(cap * 3 // 4, 100 << 20))
    except Exception:
        pass
    return 48 << 20


# --------------------------- Kernel A: projections ---------------------------
def _proj_kernel(x_ref, w_ref, a_ref, haug_ref, st_ref, *, dot_dtype):
    # h_aug = [X|1] @ [[W,0],[0,1]]  (ones column lives at lane Fp1-1)
    haug = jnp.dot(x_ref[...].astype(dot_dtype), w_ref[...].astype(dot_dtype),
                   preferred_element_type=jnp.float32)
    haug_ref[...] = haug.astype(haug_ref.dtype)     # stored once in dot_dtype
    # merged per-node logit projections: st[:,0]=h.a1, st[:,1]=h.a2 (f32 for parity)
    # (lane-sparse (tm,2) store; low priority per review)
    st_ref[...] = jnp.dot(haug, a_ref[...], preferred_element_type=jnp.float32)


# --------------------- Kernel B: attention + aggregation ---------------------
def _gat_tile_kernel(nnz_ref, fi_ref, fj_ref, shift_ref, s_ref, t_ref, mask_ref,
                     haug_ref, o_ref, *, alpha, nb_j, f_width, dot_dtype,
                     elem_dtype, multi_edges, concat, approx_recip):
    i = pl.program_id(0)
    j = pl.program_id(1)

    @pl.when(j == 0)
    def _init():
        o_ref[...] = jnp.zeros_like(o_ref)          # output block is the accumulator

    @pl.when(nnz_ref[i * nb_j + j] > 0)
    def _accumulate():
        counts = mask_ref[...]                                    # int8 [tm, tn]
        e = s_ref[...].astype(elem_dtype) + t_ref[...].astype(elem_dtype)
        e = jnp.where(e > 0, e, alpha * e)                        # LeakyReLU
        e = e + shift_ref[0, 0].astype(elem_dtype)                # global softmax shift
        ex = jnp.exp(e)
        if multi_edges:
            ex = counts.astype(elem_dtype) * ex                   # duplicate-edge counts
        # single select: discards non-edges (and any inf from unmasked huge logits)
        att = jnp.where(counts > 0, ex, jnp.zeros_like(ex))
        o_ref[...] += jnp.dot(att.astype(dot_dtype), haug_ref[...],
                              preferred_element_type=jnp.float32)

    @pl.when(j == pl.num_programs(1) - 1)
    def _finalize():
        ph = o_ref[...]                                           # [tm, Fp1] f32
        rowsum = ph[:, f_width - 1:f_width]                       # fused ones-column rowsum
        rowsum = jnp.where(rowsum == 0.0, 1.0, rowsum)            # zero-row fixup
        denom = rowsum + 1e-8
        if approx_recip:
            hp = ph * pl.reciprocal(denom, approx=True)           # EUP slot (bf16 path)
        else:
            hp = ph / denom                                       # exact for strict parity
        if concat:
            hp = jnp.where(hp > 0, hp, jnp.exp(hp) - 1.0)         # ELU
        o_ref[...] = hp


def sp_graph_attention_layer2(adj, x, W, a, alpha=0.2, concat=True,
                              block_rows=256, block_cols=512,
                              dot_dtype=jnp.float32, elem_dtype=jnp.float32,
                              multi_edges=None):
    """Forward of SpGraphAttentionLayer2 (eval mode; dropout = identity).

    adj: int [2, E] edge index (row=src, col=dst); x: [N, in_features];
    W: [in_features, out_features]; a: [1, 2*out_features].
    dot_dtype:  MXU input dtype (bf16 on v6e/v7x for throughput; f32 = strict parity).
    elem_dtype: dtype of the s+t / LeakyReLU / exp chain (bf16 only on v6e/v7x;
                keep f32 on v5e — no native bf16 VPU/EUP there).
    """
    f32 = jnp.float32
    x = x.astype(f32)
    W = W.astype(f32)
    a = a.astype(f32)
    N, d_in = x.shape
    out_f = W.shape[1]
    src = adj[0].astype(jnp.int32)
    dst = adj[1].astype(jnp.int32)

    # Tile sizes: int8 mask packs 32 sublanes; lane axis must be multiple of 128.
    tm = max(32, _round_up(int(block_rows), 32))
    tn = max(128, _round_up(int(block_cols), 128))
    Np = _round_up(N, math.lcm(tm, tn))
    nb_i, nb_j = Np // tm, Np // tn

    # Lane-dense feature width: padded features + ones column == multiple of 128.
    Fp1 = _round_up(out_f + 1, 128)
    vmem_limit = _vmem_limit_bytes()

    # [X | 1]
    x_aug = jnp.zeros((Np, d_in + 1), f32).at[:N, :d_in].set(x).at[:, d_in].set(1.0)
    # [[W, 0], [0, 1]]  (features in cols 0..out_f-1; ones column at Fp1-1)
    w_aug = (jnp.zeros((d_in + 1, Fp1), f32)
             .at[:d_in, :out_f].set(W).at[d_in, Fp1 - 1].set(1.0))
    # [a1 | a2] with zero rows for padded features and the ones column
    a12 = (jnp.zeros((Fp1, 2), f32)
           .at[:out_f, 0].set(a[0, :out_f]).at[:out_f, 1].set(a[0, out_f:]))

    # ---- Kernel A: projections (row-tiled, lane-dense h_aug in dot_dtype) ----
    h_aug, st = pl.pallas_call(
        functools.partial(_proj_kernel, dot_dtype=dot_dtype),
        out_shape=(jax.ShapeDtypeStruct((Np, Fp1), dot_dtype),
                   jax.ShapeDtypeStruct((Np, 2), f32)),
        grid=(nb_i,),
        in_specs=[pl.BlockSpec((tm, d_in + 1), lambda i: (i, 0)),
                  pl.BlockSpec((d_in + 1, Fp1), lambda i: (0, 0)),
                  pl.BlockSpec((Fp1, 2), lambda i: (0, 0))],
        out_specs=[pl.BlockSpec((tm, Fp1), lambda i: (i, 0)),
                   pl.BlockSpec((tm, 2), lambda i: (i, 0))],
        compiler_params=pltpu.CompilerParams(
            dimension_semantics=("parallel",), vmem_limit_bytes=vmem_limit),
    )(x_aug, w_aug, a12)

    # ---- glue: global per-edge min/max of the leaky-relu logits (O(E); E > 0) ----
    raw = st[src, 0] + st[dst, 1]
    e_edge = jnp.where(raw > 0, raw, alpha * raw)
    shift = (jnp.min(e_edge) - jnp.max(e_edge)).reshape(1, 1).astype(f32)

    s_col = st[:, 0:1]                         # [Np, 1]
    t_row = st[:, 1].reshape(1, Np)            # [1, Np]

    # Dense int8 edge-count mask built directly (no int32 N^2 intermediate).
    # Invariant: duplicate-edge multiplicity <= 127 (int8 wraps silently above).
    mask = jnp.zeros((Np, Np), jnp.int8).at[src, dst].add(1)

    if multi_edges is None:
        try:  # host-side check when concrete; assume duplicates under tracing
            multi_edges = bool(jnp.max(mask[src, dst]) > 1)
        except Exception:
            multi_edges = True

    # Per-(i,j)-tile edge counts (compute skip) + raster-order fetch table so
    # empty tiles reuse the previously fetched block index (Pallas dedups DMA).
    # TODO(synk): cache mask / blk_nnz / fetch tables across calls for static graphs.
    blk_nnz = jnp.zeros((nb_i * nb_j,), jnp.int32).at[
        (src // tm) * nb_j + (dst // tn)].add(1)
    flat = jnp.arange(nb_i * nb_j, dtype=jnp.int32)
    last = jnp.maximum(jax.lax.cummax(jnp.where(blk_nnz > 0, flat, -1), axis=0), 0)
    fetch_i = (last // nb_j).astype(jnp.int32)
    fetch_j = (last % nb_j).astype(jnp.int32)

    # TODO(synk): dropout on edge_e is identity in eval mode; not implemented.

    approx_recip = (dot_dtype == jnp.bfloat16)

    # ---- Kernel B: 2-D tiled attention + aggregation ----
    out = pl.pallas_call(
        functools.partial(_gat_tile_kernel, alpha=float(alpha), nb_j=nb_j,
                          f_width=Fp1, dot_dtype=dot_dtype, elem_dtype=elem_dtype,
                          multi_edges=bool(multi_edges), concat=bool(concat),
                          approx_recip=approx_recip),
        out_shape=jax.ShapeDtypeStruct((Np, Fp1), f32),
        grid_spec=pltpu.PrefetchScalarGridSpec(
            num_scalar_prefetch=3,
            grid=(nb_i, nb_j),          # j (reduction) last, marked "arbitrary"
            in_specs=[
                pl.BlockSpec(memory_space=pltpu.SMEM),                      # shift (1,1)
                pl.BlockSpec((tm, 1), lambda i, j, nnz, fi, fj: (i, 0)),     # s block
                pl.BlockSpec((1, tn),                                        # t block
                             lambda i, j, nnz, fi, fj: (0, fj[i * nb_j + j])),
                pl.BlockSpec((tm, tn),                                       # mask tile
                             lambda i, j, nnz, fi, fj: (fi[i * nb_j + j],
                                                        fj[i * nb_j + j])),
                pl.BlockSpec((tn, Fp1),                                      # h_aug tile
                             lambda i, j, nnz, fi, fj: (fj[i * nb_j + j], 0)),
            ],
            out_specs=pl.BlockSpec((tm, Fp1),
                                   lambda i, j, nnz, fi, fj: (i, 0)),
        ),
        compiler_params=pltpu.CompilerParams(
            dimension_semantics=("parallel", "arbitrary"),   # row blocks shard on v7x TCs
            vmem_limit_bytes=vmem_limit),
    )(blk_nnz, fetch_i, fetch_j, shift, s_col, t_row, mask, h_aug)

    return out[:N, :out_f]


def _xavier_normal(key, shape, gain):
    std = gain * (2.0 / (shape[0] + shape[1])) ** 0.5
    return std * jax.random.normal(key, shape, jnp.float32)


def _reference(adj, x, W, a, alpha, concat=True):
    # pure-JAX reference of the torch forward
    h = x @ W
    src, dst = adj[0], adj[1]
    edge_h = jnp.concatenate([h[src], h[dst]], axis=1)          # [E, 2F]
    e = (edge_h @ a[0]).reshape(-1)
    e = jnp.where(e > 0, e, alpha * e)
    e = e + e.min() - e.max()
    edge_e = jnp.exp(e)
    N = x.shape[0]
    rowsum = jnp.zeros((N, 1)).at[src, 0].add(edge_e)
    rowsum = jnp.where(rowsum == 0.0, 1.0, rowsum)
    hp = jnp.zeros_like(h).at[src].add(edge_e[:, None] * h[dst])
    hp = hp / (rowsum + 1e-8)
    return jnp.where(hp > 0, hp, jnp.exp(hp) - 1.0) if concat else hp


if __name__ == "__main__":
    N, in_features, out_features = 200, 64, 32     # N not a tile multiple: tests padding
    alpha = 0.2

    key = jax.random.PRNGKey(0)
    kW, kA, kX = jax.random.split(key, 3)
    W = _xavier_normal(kW, (in_features, out_features), 1.414)
    a = _xavier_normal(kA, (1, 2 * out_features), 1.414)
    x = jax.random.normal(kX, (N, in_features), jnp.float32)

    # Edge index: self loops + ring + one duplicated edge (exercises multiplicity).
    idx = jnp.arange(N, dtype=jnp.int32)
    src = jnp.concatenate([idx, idx, jnp.array([0], jnp.int32)])
    dst = jnp.concatenate([idx, (idx + 1) % N, jnp.array([1], jnp.int32)])
    adj = jnp.stack([src, dst], axis=0)

    ref = _reference(adj, x, W, a, alpha)

    # Full-precision path: strict parity with the reference.
    out = sp_graph_attention_layer2(adj, x, W, a, alpha=alpha, concat=True)
    out = jax.block_until_ready(out)
    assert out.shape == (N, out_features)
    err = float(jnp.max(jnp.abs(out - ref)))
    assert err < 2e-4, err

    # bf16 MXU inputs, f32 elementwise chain (safe on v5e): loose parity.
    out_b = sp_graph_attention_layer2(adj, x, W, a, alpha=alpha, concat=True,
                                      dot_dtype=jnp.bfloat16)
    out_b = jax.block_until_ready(out_b)
    assert bool(jnp.all(jnp.isfinite(out_b)))
    err_b = float(jnp.max(jnp.abs(out_b - ref)))
    assert err_b < 5e-2, err_b

    # bf16 MXU + bf16 elementwise chain (v6e/v7x throughput knob): sanity check.
    out_bb = sp_graph_attention_layer2(adj, x, W, a, alpha=alpha, concat=True,
                                       dot_dtype=jnp.bfloat16,
                                       elem_dtype=jnp.bfloat16)
    out_bb = jax.block_until_ready(out_bb)
    assert bool(jnp.all(jnp.isfinite(out_bb)))
    err_bb = float(jnp.max(jnp.abs(out_bb - ref)))
    assert err_bb < 5e-1, err_bb

    print("KERNEL_OK")
</pallas_src>

<mosaic_0001>
module attributes {stable_mosaic.version = 11 : i64} {
  func.func @_proj_kernel(%arg0: i32, %arg1: memref<256x65xf32, #tpu.memory_space<vmem>>, %arg2: memref<65x128xf32, #tpu.memory_space<vmem>>, %arg3: memref<128x2xf32, #tpu.memory_space<vmem>>, %arg4: memref<256x128xf32, #tpu.memory_space<vmem>>, %arg5: memref<256x2xf32, #tpu.memory_space<vmem>>) attributes {dimension_semantics = [#tpu.dimension_semantics<parallel>], iteration_bounds = array<i64: 2>, scalar_prefetch = 0 : i64, scratch_operands = 0 : i64, tpu.core_type = #tpu.core_type<tc>, window_params = [{transform_indices = @transform_0, window_bounds = array<i64: 256, 65>}, {pipeline_mode = #tpu.pipeline_mode<synchronous>, transform_indices = @transform_1, window_bounds = array<i64: 65, 128>}, {pipeline_mode = #tpu.pipeline_mode<synchronous>, transform_indices = @transform_2, window_bounds = array<i64: 128, 2>}, {transform_indices = @transform_3, window_bounds = array<i64: 256, 128>}, {transform_indices = @transform_4, window_bounds = array<i64: 256, 2>}]} {
    %c0 = arith.constant 0 : index
    %c0_0 = arith.constant 0 : index
    %0 = vector.load %arg1[%c0, %c0_0] : memref<256x65xf32, #tpu.memory_space<vmem>>, vector<256x65xf32>
    %c0_1 = arith.constant 0 : index
    %c0_2 = arith.constant 0 : index
    %1 = vector.load %arg2[%c0_1, %c0_2] : memref<65x128xf32, #tpu.memory_space<vmem>>, vector<65x128xf32>
    %cst = arith.constant dense<0.000000e+00> : vector<256x128xf32>
    %2 = tpu.matmul %0, %1, %cst {dimension_numbers = #tpu.dot_dimension_numbers<[1], [0], [0], [1], [0, 0, 1, 1], [], []>} : vector<256x65xf32>, vector<65x128xf32>, vector<256x128xf32> -> vector<256x128xf32>
    %c0_3 = arith.constant 0 : index
    %c0_4 = arith.constant 0 : index
    %3 = vector.load %arg4[%c0_3, %c0_4] : memref<256x128xf32, #tpu.memory_space<vmem>>, vector<256x128xf32>
    tpu.vector_store %arg4[%c0_3, %c0_4], %2 {strides = array<i32>} : memref<256x128xf32, #tpu.memory_space<vmem>>, vector<256x128xf32>,
    %c0_5 = arith.constant 0 : index
    %c0_6 = arith.constant 0 : index
    %4 = vector.load %arg3[%c0_5, %c0_6] : memref<128x2xf32, #tpu.memory_space<vmem>>, vector<128x2xf32>
    %cst_7 = arith.constant dense<0.000000e+00> : vector<256x2xf32>
    %5 = tpu.matmul %2, %4, %cst_7 {dimension_numbers = #tpu.dot_dimension_numbers<[1], [0], [0], [1], [0, 0, 1, 1], [], []>} : vector<256x128xf32>, vector<128x2xf32>, vector<256x2xf32> -> vector<256x2xf32>
    %c0_8 = arith.constant 0 : index
    %c0_9 = arith.constant 0 : index
    %6 = vector.load %arg5[%c0_8, %c0_9] : memref<256x2xf32, #tpu.memory_space<vmem>>, vector<256x2xf32>
    tpu.vector_store %arg5[%c0_8, %c0_9], %5 {strides = array<i32>} : memref<256x2xf32, #tpu.memory_space<vmem>>, vector<256x2xf32>,
    return
  }
  func.func @transform_0(%arg0: i32) -> (i32, i32) {
    %c0_i32 = arith.constant 0 : i32
    %c0_i32_0 = arith.constant 0 : i32
    return %arg0, %c0_i32 : i32, i32
  }
  func.func @transform_1(%arg0: i32) -> (i32, i32) {
    %c0_i32 = arith.constant 0 : i32
    %c0_i32_0 = arith.constant 0 : i32
    %c0_i32_1 = arith.constant 0 : i32
    return %c0_i32, %c0_i32_0 : i32, i32
  }
  func.func @transform_2(%arg0: i32) -> (i32, i32) {
    %c0_i32 = arith.constant 0 : i32
    %c0_i32_0 = arith.constant 0 : i32
    %c0_i32_1 = arith.constant 0 : i32
    return %c0_i32, %c0_i32_0 : i32, i32
  }
  func.func @transform_3(%arg0: i32) -> (i32, i32) {
    %c0_i32 = arith.constant 0 : i32
    %c0_i32_0 = arith.constant 0 : i32
    return %arg0, %c0_i32 : i32, i32
  }
  func.func @transform_4(%arg0: i32) -> (i32, i32) {
    %c0_i32 = arith.constant 0 : i32
    %c0_i32_0 = arith.constant 0 : i32
    return %arg0, %c0_i32 : i32, i32
  }
}

</mosaic_0001>

<llo_original>
// kernel: tpu_custom_call.1
$region0: #{tpu_custom_call.1}
  #allocation0 [shape = 'u32[]', space=smem, size = 0x4, offset = 0x4, fixed_abs, tag = 'smem constant byte address 0x4 - core index']
  #allocation1 [shape = 'u32[72,128]{1,0:T(1,128)}', space=vmem, size = 0x9000, scoped, tag = 'internal scratch']
  %s0 = inlined_call_operand.vmem [shape: f32[512,65], index: 0, kind: input, shape index: {}]
  %s1 = inlined_call_operand.vmem [shape: f32[65,128], index: 1, kind: input, shape index: {}]
  %s2 = inlined_call_operand.vmem [shape: f32[128,2], index: 2, kind: input, shape index: {}]
  %s3 = inlined_call_operand.hbm [shape: f32[512,128], index: 3, kind: output, shape index: {0}]
  %s4 = inlined_call_operand.vmem [shape: f32[512,2], index: 4, kind: output, shape index: {1}]
  %5 = xla_tuple %s3, %s4
  %s6 = sld [smem:[#allocation0]]
  $region53: #{tpu_custom_call.1} parent=0
    _
  %s8 = ssub.s32 1, %s6
  %s9 = scalar_select 0, %s8, %s6
  $region1: #{tpu_custom_call.1} parent=0
    #allocation2 [shape = 'u8[262144]{0}', space=vmem, size = 0x40000, scoped, tag = 'output window, operand 0']
    #allocation3 [shape = 's32[2]{0}', space=sflag, size = 0x8, scoped, tag = 'scoped memory for tpu_custom_call.1']
    %10 = vsyncpa [#allocation3], 0
    %s11 = scalar_lea.sflag [#allocation3], 1
    %12 = vsyncpa %s11, 0
    loop: start=0, step=1, limit=4
    $region2: #{tpu_custom_call.1} parent=1 // loop_pre_header
      _
    $region3: #{tpu_custom_call.1} parent=1 // loop_header
      %s14 = sphi 0, %s18
      %p15 = scmp.ge.s32.totalorder %s14, 4
      %s24 = sphi 0, %s26
      %s27 = sphi 0, %s24
      %s28 = sphi 0, %s27
      %s44 = sphi 0, %s28
      %s48 = sphi 0, %s48
      %s50 = sphi 0, %s48
      %s51 = sphi 0, %s50
      %s65 = sphi 0, %s51
      %s69 = sphi 0, %s69
      %s71 = sphi 0, %s69
      %s72 = sphi 0, %s71
      %s86 = sphi 0, %s72
      %s92 = sphi 0, %s94
      %s95 = sphi 0, %s92
      %s96 = sphi 0, %s95
      %s112 = sphi 0, %s96
      %s118 = sphi 0, %s120
      %s121 = sphi 0, %s118
      %s122 = sphi 0, %s121
      %s138 = sphi 0, %s122
    $region4: #{tpu_custom_call.1} parent=1 // loop_header_branch
      %17 = sbr.rel (%p15) target = $region8
    $region5: #{tpu_custom_call.1} parent=1 // loop_body
      %s19 = ssub.s32 %s14, 1
      %s20 = ssub.s32 %s14, 2
      %s21 = sadd.s32 %s14, 1
      %s22 = ssub.s32 %s14, %s21
      %p23 = scmp.eq.s32.totalorder %s22, 0
      %s25 = sadd.s32 %s24, 1
      %s26 = scalar_select %p23, %s24, %s25
      %p29 = pneg %p23
      %p30 = scmp.eq.s32.totalorder %s14, 1
      %p31 = por %p29, %p30
      %p32 = scmp.ne.s32.totalorder %s24, %s27
      %p33 = scmp.eq.s32.totalorder %s14, 0
      %p34 = por %p32, %p33
      %p35 = scmp.ne.s32.totalorder %s24, %s27
      %p36 = scmp.eq.s32.totalorder %s19, 1
      %p37 = por %p35, %p36
      %p38 = scmp.ne.s32.totalorder %s27, %s28
      %p39 = scmp.eq.s32.totalorder %s19, 0
      %p40 = por %p38, %p39
      %p41 = scmp.ne.s32.totalorder %s27, %s28
      %p42 = scmp.eq.s32.totalorder %s20, 1
      %p43 = por %p41, %p42
      %p45 = scmp.ne.s32.totalorder %s28, %s44
      %p46 = scmp.eq.s32.totalorder %s20, 0
      %p47 = por %p45, %p46
      %s49 = sadd.s32 %s48, 1
      %p52 = scmp.eq.s32.totalorder %s14, 1
      %p53 = scmp.ne.s32.totalorder %s48, %s50
      %p54 = scmp.eq.s32.totalorder %s14, 0
      %p55 = por %p53, %p54
      %p56 = scmp.ne.s32.totalorder %s48, %s50
      %p57 = scmp.eq.s32.totalorder %s19, 1
      %p58 = por %p56, %p57
      %p59 = scmp.ne.s32.totalorder %s50, %s51
      %p60 = scmp.eq.s32.totalorder %s19, 0
      %p61 = por %p59, %p60
      %p62 = scmp.ne.s32.totalorder %s50, %s51
      %p63 = scmp.eq.s32.totalorder %s20, 1
      %p64 = por %p62, %p63
      %p66 = scmp.ne.s32.totalorder %s51, %s65
      %p67 = scmp.eq.s32.totalorder %s20, 0
      %p68 = por %p66, %p67
      %s70 = sadd.s32 %s69, 1
      %p73 = scmp.eq.s32.totalorder %s14, 1
      %p74 = scmp.ne.s32.totalorder %s69, %s71
      %p75 = scmp.eq.s32.totalorder %s14, 0
      %p76 = por %p74, %p75
      %p77 = scmp.ne.s32.totalorder %s69, %s71
      %p78 = scmp.eq.s32.totalorder %s19, 1
      %p79 = por %p77, %p78
      %p80 = scmp.ne.s32.totalorder %s71, %s72
      %p81 = scmp.eq.s32.totalorder %s19, 0
      %p82 = por %p80, %p81
      %p83 = scmp.ne.s32.totalorder %s71, %s72
      %p84 = scmp.eq.s32.totalorder %s20, 1
      %p85 = por %p83, %p84
      %p87 = scmp.ne.s32.totalorder %s72, %s86
      %p88 = scmp.eq.s32.totalorder %s20, 0
      %p89 = por %p87, %p88
      %s90 = ssub.s32 %s14, %s21
      %p91 = scmp.eq.s32.totalorder %s90, 0
      %s93 = sadd.s32 %s92, 1
      %s94 = scalar_select %p91, %s92, %s93
      %p97 = pneg %p91
      %p98 = scmp.eq.s32.totalorder %s14, 1
      %p99 = por %p97, %p98
      %p100 = scmp.ne.s32.totalorder %s92, %s95
      %p101 = scmp.eq.s32.totalorder %s14, 0
      %p102 = por %p100, %p101
      %p103 = scmp.ne.s32.totalorder %s92, %s95
      %p104 = scmp.eq.s32.totalorder %s19, 1
      %p105 = por %p103, %p104
      %p106 = scmp.ne.s32.totalorder %s95, %s96
      %p107 = scmp.eq.s32.totalorder %s19, 0
      %p108 = por %p106, %p107
      %p109 = scmp.ne.s32.totalorder %s95, %s96
      %p110 = scmp.eq.s32.totalorder %s20, 1
      %p111 = por %p109, %p110
      %p113 = scmp.ne.s32.totalorder %s96, %s112
      %p114 = scmp.eq.s32.totalorder %s20, 0
      %p115 = por %p113, %p114
      %s116 = ssub.s32 %s14, %s21
      %p117 = scmp.eq.s32.totalorder %s116, 0
      %s119 = sadd.s32 %s118, 1
      %s120 = scalar_select %p117, %s118, %s119
      %p123 = pneg %p117
      %p124 = scmp.eq.s32.totalorder %s14, 1
      %p125 = por %p123, %p124
      %p126 = scmp.ne.s32.totalorder %s118, %s121
      %p127 = scmp.eq.s32.totalorder %s14, 0
      %p128 = por %p126, %p127
      %p129 = scmp.ne.s32.totalorder %s118, %s121
      %p130 = scmp.eq.s32.totalorder %s19, 1
      %p131 = por %p129, %p130
      %p132 = scmp.ne.s32.totalorder %s121, %s122
      %p133 = scmp.eq.s32.totalorder %s19, 0
      %p134 = por %p132, %p133
      %p135 = scmp.ne.s32.totalorder %s121, %s122
      %p136 = scmp.eq.s32.totalorder %s20, 1
      %p137 = por %p135, %p136
      %p139 = scmp.ne.s32.totalorder %s122, %s138
      %p140 = scmp.eq.s32.totalorder %s20, 0
      %p141 = por %p139, %p140
      %p142 = scmp.le.s32.totalorder 1, %s14
      %p143 = scmp.lt.s32.totalorder %s14, 3
      %p144 = pnand %p142, %p143
      %p145 = pneg %p144
      // Predicated region
      $region9: #{tpu_custom_call.1} parent=5 // pred_check
        _
      $region10: #{tpu_custom_call.1} parent=5 // pred_check_branch
        %147 = sbr.rel (%p144) target = $region12
      $region11: #{tpu_custom_call.1} parent=5 // pred_region
        %s148 = ssub.s32 %s14, 1
        // Predicated region
        $region13: #{tpu_custom_call.1} parent=11 // pred_check
          %p149 = pneg %p61
        $region14: #{tpu_custom_call.1} parent=11 // pred_check_branch
          %151 = sbr.rel (%p149) target = $region16
        $region15: #{tpu_custom_call.1} parent=11 // pred_region
          _
        $region16: #{tpu_custom_call.1} parent=11 // pred_fallthru
          _
        // Predicated region
        $region17: #{tpu_custom_call.1} parent=11 // pred_check
          %p152 = pneg %p82
        $region18: #{tpu_custom_call.1} parent=11 // pred_check_branch
          %154 = sbr.rel (%p152) target = $region20
        $region19: #{tpu_custom_call.1} parent=11 // pred_region
          _
        $region20: #{tpu_custom_call.1} parent=11 // pred_fallthru
          _
      $region12: #{tpu_custom_call.1} parent=5 // pred_fallthru
        _
      %p155 = scmp.lt.s32.totalorder %s14, 2
      // Predicated region
      $region21: #{tpu_custom_call.1} parent=5 // pred_check
        %p156 = pneg %p155
      $region22: #{tpu_custom_call.1} parent=5 // pred_check_branch
        %158 = sbr.rel (%p156) target = $region24
      $region23: #{tpu_custom_call.1} parent=5 // pred_region
        // Predicated region
        $region25: #{tpu_custom_call.1} parent=23 // pred_check
          %p159 = pneg %p34
        $region26: #{tpu_custom_call.1} parent=23 // pred_check_branch
          %161 = sbr.rel (%p159) target = $region28
        $region27: #{tpu_custom_call.1} parent=23 // pred_region
          %s162 = smul.u32 32, %s14
          %p163 = scmp.lt.s32.totalorder %s162, 63
          %s164 = scalar_select %p163, %s162, 63
          %s165 = smul.addr %s164, 8
          %s166 = scalar_lea.vmem %s0, %s165
          %s167 = smul.u32 32, %s14
        $region28: #{tpu_custom_call.1} parent=23 // pred_fallthru
          _
      $region24: #{tpu_custom_call.1} parent=5 // pred_fallthru
        _
      %p168 = scmp.le.s32.totalorder 1, %s14
      %p169 = scmp.lt.s32.totalorder %s14, 3
      %p170 = pnand %p168, %p169
      %p171 = pneg %p170
      // Predicated region
      $region29: #{tpu_custom_call.1} parent=5 // pred_check
        _
      $region30: #{tpu_custom_call.1} parent=5 // pred_check_branch
        %173 = sbr.rel (%p170) target = $region32
      $region31: #{tpu_custom_call.1} parent=5 // pred_region
        %s174 = ssub.s32 %s14, 1
        %s175 = smul.u32 32, %s19
        %p176 = scmp.lt.s32.totalorder %s175, 63
        %s177 = scalar_select %p176, %s175, 63
        %s178 = smul.addr %s177, 8
        %s179 = scalar_lea.vmem %s0, %s178
        %p180 = pneg %p40
        %p181 = pneg %p37
        %p182 = pneg %p61
        %p183 = pneg %p58
        %p184 = pneg %p82
        %p185 = pneg %p79
        %p186 = pneg %p108
        %p187 = pneg %p105
        %s188 = sand.u32 %s95, 1
        %s189 = scalar_lea.sflag [#allocation3], %s188
        %s190 = sand.u32 %s95, 1
        %s191 = smul.addr %s190, 256
        %s192 = scalar_lea.vmem [#allocation2], %s191
        %p193 = pneg %p134
        %p194 = pneg %p131
        %s195 = smul.u32 32, %s19
        %p196 = scmp.lt.s32.totalorder %s195, 63
        %s197 = scalar_select %p196, %s195, 63
        %s198 = smul.addr %s197, 8
        %s199 = scalar_lea.vmem %s4, %s198
        %s200 = smul.u32 32, %s19
        %p201 = scmp.lt.s32.totalorder %s200, 63
        %s202 = scalar_select %p201, %s200, 63
        %s203 = smul.addr %s202, 8
        %s204 = scalar_lea.vmem %s0, %s203
        %s205 = smul.u32 32, %s19
        %s206 = smul.u32 32, %s19
        %s207 = smul.u32 32, %s19
        %p208 = scmp.lt.s32.totalorder %s207, 63
        %s209 = scalar_select %p208, %s207, 63
        %s210 = smul.addr %s209, 8
        %s211 = scalar_lea.vmem %s4, %s210
        %s212 = smul.u32 32, %s19
        %v213 = vld [vmem:[%s204] sm:$0xff]
        %v214 = vld [vmem:[%s204 + $0x8] sm:$0xff]
        %v215 = vld [vmem:[%s204 + $0x10] sm:$0xff]
        %v216 = vld [vmem:[%s204 + $0x18] sm:$0xff]
        %v217 = vld [vmem:[%s204 + $0x20] sm:$0xff]
        %v218 = vld [vmem:[%s204 + $0x28] sm:$0xff]
        %v219 = vld [vmem:[%s204 + $0x30] sm:$0xff]
        %v220 = vld [vmem:[%s204 + $0x38] sm:$0xff]
        %v221 = vld [vmem:[%s204 + $0x40] sm:$0xff]
        %v222 = vld [vmem:[%s204 + $0x48] sm:$0xff]
        %v223 = vld [vmem:[%s204 + $0x50] sm:$0xff]
        %v224 = vld [vmem:[%s204 + $0x58] sm:$0xff]
        %v225 = vld [vmem:[%s204 + $0x60] sm:$0xff]
        %v226 = vld [vmem:[%s204 + $0x68] sm:$0xff]
        %v227 = vld [vmem:[%s204 + $0x70] sm:$0xff]
        %v228 = vld [vmem:[%s204 + $0x78] sm:$0xff]
        %v229 = vld [vmem:[%s204 + $0x80] sm:$0xff]
        %v230 = vld [vmem:[%s204 + $0x88] sm:$0xff]
        %v231 = vld [vmem:[%s204 + $0x90] sm:$0xff]
        %v232 = vld [vmem:[%s204 + $0x98] sm:$0xff]
        %v233 = vld [vmem:[%s204 + $0xa0] sm:$0xff]
        %v234 = vld [vmem:[%s204 + $0xa8] sm:$0xff]
        %v235 = vld [vmem:[%s204 + $0xb0] sm:$0xff]
        %v236 = vld [vmem:[%s204 + $0xb8] sm:$0xff]
        %v237 = vld [vmem:[%s204 + $0xc0] sm:$0xff]
        %v238 = vld [vmem:[%s204 + $0xc8] sm:$0xff]
        %v239 = vld [vmem:[%s204 + $0xd0] sm:$0xff]
        %v240 = vld [vmem:[%s204 + $0xd8] sm:$0xff]
        %v241 = vld [vmem:[%s204 + $0xe0] sm:$0xff]
        %v242 = vld [vmem:[%s204 + $0xe8] sm:$0xff]
        %v243 = vld [vmem:[%s204 + $0xf0] sm:$0xff]
        %v244 = vld [vmem:[%s204 + $0xf8] sm:$0xff]
        %v245 = vld [vmem:[%s1] sm:$0xff]
        %v246 = vld [vmem:[%s1 + $0x8] sm:$0xff]
        %v247 = vld [vmem:[%s1 + $0x10] sm:$0xff]
        %v248 = vld [vmem:[%s1 + $0x18] sm:$0xff]
        %v249 = vld [vmem:[%s1 + $0x20] sm:$0xff]
        %v250 = vld [vmem:[%s1 + $0x28] sm:$0xff]
        %v251 = vld [vmem:[%s1 + $0x30] sm:$0xff]
        %v252 = vld [vmem:[%s1 + $0x38] sm:$0xff]
        %v253 = vld [vmem:[%s1 + $0x40] sm:$0x1]
        %vm254 = vcmask 531456
        %v256 = vsel %vm254, %v213, 0
        %v259 = vsel %vm254, %v214, 0
        %v262 = vsel %vm254, %v215, 0
        %v265 = vsel %vm254, %v216, 0
        %v268 = vsel %vm254, %v217, 0
        %v271 = vsel %vm254, %v218, 0
        %v274 = vsel %vm254, %v219, 0
        %v277 = vsel %vm254, %v220, 0
        %v280 = vsel %vm254, %v221, 0
        %v283 = vsel %vm254, %v222, 0
        %v286 = vsel %vm254, %v223, 0
        %v289 = vsel %vm254, %v224, 0
        %v292 = vsel %vm254, %v225, 0
        %v295 = vsel %vm254, %v226, 0
        %v298 = vsel %vm254, %v227, 0
        %v301 = vsel %vm254, %v228, 0
        %v304 = vsel %vm254, %v229, 0
        %v307 = vsel %vm254, %v230, 0
        %v310 = vsel %vm254, %v231, 0
        %v313 = vsel %vm254, %v232, 0
        %v316 = vsel %vm254, %v233, 0
        %v319 = vsel %vm254, %v234, 0
        %v322 = vsel %vm254, %v235, 0
        %v325 = vsel %vm254, %v236, 0
        %v328 = vsel %vm254, %v237, 0
        %v331 = vsel %vm254, %v238, 0
        %v334 = vsel %vm254, %v239, 0
        %v337 = vsel %vm254, %v240, 0
        %v340 = vsel %vm254, %v241, 0
        %v343 = vsel %vm254, %v242, 0
        %v346 = vsel %vm254, %v243, 0
        %v349 = vsel %vm254, %v244, 0
        %vm351 = vcmask 1040384
        %v353 = vsel %vm351, %v253, 0
        %355 = vmatpush.msra.mxu0 0.0
        %356 = vmatpush.msra.mxu0 0.0
        %357 = vmatpush.msra.mxu0 0.0
        %358 = vmatpush.msra.mxu0 0.0
        %359 = vmatpush.msra.mxu0 0.0
        %360 = vmatpush.msra.mxu0 0.0
        %361 = vmatpush.msra.mxu0 0.0
        %362 = vmatpush.msra.mxu0 %v353
        %363 = vmatpush.msra.mxu0 %v252
        %364 = vmatpush.msra.mxu0 %v251
        %365 = vmatpush.msra.mxu0 %v250
        %366 = vmatpush.msra.mxu0 %v249
        %367 = vmatpush.msra.mxu0 %v248
        %368 = vmatpush.msra.mxu0 %v247
        %369 = vmatpush.msra.mxu0 %v246
        %370 = vmatpush.msra.mxu0 %v245
        %371 = vmatmul.f32.gmra.mxu0 %v256
        %v372 = vpop.f32.mrf.mxu0
        %v373 = vadd.f32 0.0, %v372
        %374 = vmatmul.f32.gmra.mxu0 %v259
        %v375 = vpop.f32.mrf.mxu0
        %v376 = vadd.f32 0.0, %v375
        %377 = vmatmul.f32.gmra.mxu0 %v262
        %v378 = vpop.f32.mrf.mxu0
        %v379 = vadd.f32 0.0, %v378
        %380 = vmatmul.f32.gmra.mxu0 %v265
        %v381 = vpop.f32.mrf.mxu0
        %v382 = vadd.f32 0.0, %v381
        %383 = vmatmul.f32.gmra.mxu0 %v268
        %v384 = vpop.f32.mrf.mxu0
        %v385 = vadd.f32 0.0, %v384
        %386 = vmatmul.f32.gmra.mxu0 %v271
        %v387 = vpop.f32.mrf.mxu0
        %v388 = vadd.f32 0.0, %v387
        %389 = vmatmul.f32.gmra.mxu0 %v274
        %v390 = vpop.f32.mrf.mxu0
        %v391 = vadd.f32 0.0, %v390
        %392 = vmatmul.f32.gmra.mxu0 %v277
        %v393 = vpop.f32.mrf.mxu0
        %v394 = vadd.f32 0.0, %v393
        %395 = vmatmul.f32.gmra.mxu0 %v280
        %v396 = vpop.f32.mrf.mxu0
        %v397 = vadd.f32 0.0, %v396
        %398 = vmatmul.f32.gmra.mxu0 %v283
        %v399 = vpop.f32.mrf.mxu0
        %v400 = vadd.f32 0.0, %v399
        %401 = vmatmul.f32.gmra.mxu0 %v286
        %v402 = vpop.f32.mrf.mxu0
        %v403 = vadd.f32 0.0, %v402
        %404 = vmatmul.f32.gmra.mxu0 %v289
        %v405 = vpop.f32.mrf.mxu0
        %v406 = vadd.f32 0.0, %v405
        %407 = vmatmul.f32.gmra.mxu0 %v292
        %v408 = vpop.f32.mrf.mxu0
        %v409 = vadd.f32 0.0, %v408
        %410 = vmatmul.f32.gmra.mxu0 %v295
        %v411 = vpop.f32.mrf.mxu0
        %v412 = vadd.f32 0.0, %v411
        %413 = vmatmul.f32.gmra.mxu0 %v298
        %v414 = vpop.f32.mrf.mxu0
        %v415 = vadd.f32 0.0, %v414
        %416 = vmatmul.f32.gmra.mxu0 %v301
        %v417 = vpop.f32.mrf.mxu0
        %v418 = vadd.f32 0.0, %v417
        %419 = vmatmul.f32.gmra.mxu0 %v304
        %v420 = vpop.f32.mrf.mxu0
        %v421 = vadd.f32 0.0, %v420
        %422 = vmatmul.f32.gmra.mxu0 %v307
        %v423 = vpop.f32.mrf.mxu0
        %v424 = vadd.f32 0.0, %v423
        %425 = vmatmul.f32.gmra.mxu0 %v310
        %v426 = vpop.f32.mrf.mxu0
        %v427 = vadd.f32 0.0, %v426
        %428 = vmatmul.f32.gmra.mxu0 %v313
        %v429 = vpop.f32.mrf.mxu0
        %v430 = vadd.f32 0.0, %v429
        %431 = vmatmul.f32.gmra.mxu0 %v316
        %v432 = vpop.f32.mrf.mxu0
        %v433 = vadd.f32 0.0, %v432
        %434 = vmatmul.f32.gmra.mxu0 %v319
        %v435 = vpop.f32.mrf.mxu0
        %v436 = vadd.f32 0.0, %v435
        %437 = vmatmul.f32.gmra.mxu0 %v322
        %v438 = vpop.f32.mrf.mxu0
        %v439 = vadd.f32 0.0, %v438
        %440 = vmatmul.f32.gmra.mxu0 %v325
        %v441 = vpop.f32.mrf.mxu0
        %v442 = vadd.f32 0.0, %v441
        %443 = vmatmul.f32.gmra.mxu0 %v328
        %v444 = vpop.f32.mrf.mxu0
        %v445 = vadd.f32 0.0, %v444
        %446 = vmatmul.f32.gmra.mxu0 %v331
        %v447 = vpop.f32.mrf.mxu0
        %v448 = vadd.f32 0.0, %v447
        %449 = vmatmul.f32.gmra.mxu0 %v334
        %v450 = vpop.f32.mrf.mxu0
        %v451 = vadd.f32 0.0, %v450
        %452 = vmatmul.f32.gmra.mxu0 %v337
        %v453 = vpop.f32.mrf.mxu0
        %v454 = vadd.f32 0.0, %v453
        %455 = vmatmul.f32.gmra.mxu0 %v340
        %v456 = vpop.f32.mrf.mxu0
        %v457 = vadd.f32 0.0, %v456
        %458 = vmatmul.f32.gmra.mxu0 %v343
        %v459 = vpop.f32.mrf.mxu0
        %v460 = vadd.f32 0.0, %v459
        %461 = vmatmul.f32.gmra.mxu0 %v346
        %v462 = vpop.f32.mrf.mxu0
        %v463 = vadd.f32 0.0, %v462
        %464 = vmatmul.f32.gmra.mxu0 %v349
        %v465 = vpop.f32.mrf.mxu0
        %v466 = vadd.f32 0.0, %v465
        %467 = vdwg.mxu0
        %468 = vst [vmem:[%s192] sm:$0xff] %v373
        %469 = vst [vmem:[%s192 + $0x8] sm:$0xff] %v376
        %470 = vst [vmem:[%s192 + $0x10] sm:$0xff] %v379
        %471 = vst [vmem:[%s192 + $0x18] sm:$0xff] %v382
        %472 = vst [vmem:[%s192 + $0x20] sm:$0xff] %v385
        %473 = vst [vmem:[%s192 + $0x28] sm:$0xff] %v388
        %474 = vst [vmem:[%s192 + $0x30] sm:$0xff] %v391
        %475 = vst [vmem:[%s192 + $0x38] sm:$0xff] %v394
        %476 = vst [vmem:[%s192 + $0x40] sm:$0xff] %v397
        %477 = vst [vmem:[%s192 + $0x48] sm:$0xff] %v400
        %478 = vst [vmem:[%s192 + $0x50] sm:$0xff] %v403
        %479 = vst [vmem:[%s192 + $0x58] sm:$0xff] %v406
        %480 = vst [vmem:[%s192 + $0x60] sm:$0xff] %v409
        %481 = vst [vmem:[%s192 + $0x68] sm:$0xff] %v412
        %482 = vst [vmem:[%s192 + $0x70] sm:$0xff] %v415
        %483 = vst [vmem:[%s192 + $0x78] sm:$0xff] %v418
        %484 = vst [vmem:[%s192 + $0x80] sm:$0xff] %v421
        %485 = vst [vmem:[%s192 + $0x88] sm:$0xff] %v424
        %486 = vst [vmem:[%s192 + $0x90] sm:$0xff] %v427
        %487 = vst [vmem:[%s192 + $0x98] sm:$0xff] %v430
        %488 = vst [vmem:[%s192 + $0xa0] sm:$0xff] %v433
        %489 = vst [vmem:[%s192 + $0xa8] sm:$0xff] %v436
        %490 = vst [vmem:[%s192 + $0xb0] sm:$0xff] %v439
        %491 = vst [vmem:[%s192 + $0xb8] sm:$0xff] %v442
        %492 = vst [vmem:[%s192 + $0xc0] sm:$0xff] %v445
        %493 = vst [vmem:[%s192 + $0xc8] sm:$0xff] %v448
        %494 = vst [vmem:[%s192 + $0xd0] sm:$0xff] %v451
        %495 = vst [vmem:[%s192 + $0xd8] sm:$0xff] %v454
        %496 = vst [vmem:[%s192 + $0xe0] sm:$0xff] %v457
        %497 = vst [vmem:[%s192 + $0xe8] sm:$0xff] %v460
        %498 = vst [vmem:[%s192 + $0xf0] sm:$0xff] %v463
        %499 = vst [vmem:[%s192 + $0xf8] sm:$0xff] %v466
        %v500 = vld [vmem:[%s2] sm:$0xff]
        %v501 = vld [vmem:[%s2 + $0x8] sm:$0xff]
        %v502 = vld [vmem:[%s2 + $0x10] sm:$0xff]
        %v503 = vld [vmem:[%s2 + $0x18] sm:$0xff]
        %v504 = vld [vmem:[%s2 + $0x20] sm:$0xff]
        %v505 = vld [vmem:[%s2 + $0x28] sm:$0xff]
        %v506 = vld [vmem:[%s2 + $0x30] sm:$0xff]
        %v507 = vld [vmem:[%s2 + $0x38] sm:$0xff]
        %v508 = vld [vmem:[%s2 + $0x40] sm:$0xff]
        %v509 = vld [vmem:[%s2 + $0x48] sm:$0xff]
        %v510 = vld [vmem:[%s2 + $0x50] sm:$0xff]
        %v511 = vld [vmem:[%s2 + $0x58] sm:$0xff]
        %v512 = vld [vmem:[%s2 + $0x60] sm:$0xff]
        %v513 = vld [vmem:[%s2 + $0x68] sm:$0xff]
        %v514 = vld [vmem:[%s2 + $0x70] sm:$0xff]
        %v515 = vld [vmem:[%s2 + $0x78] sm:$0xff]
        %516 = vmatpush.msra.mxu0 %v515
        %517 = vmatpush.msra.mxu0 %v514
        %518 = vmatpush.msra.mxu0 %v513
        %519 = vmatpush.msra.mxu0 %v512
        %520 = vmatpush.msra.mxu0 %v511
        %521 = vmatpush.msra.mxu0 %v510
        %522 = vmatpush.msra.mxu0 %v509
        %523 = vmatpush.msra.mxu0 %v508
        %524 = vmatpush.msra.mxu0 %v507
        %525 = vmatpush.msra.mxu0 %v506
        %526 = vmatpush.msra.mxu0 %v505
        %527 = vmatpush.msra.mxu0 %v504
        %528 = vmatpush.msra.mxu0 %v503
        %529 = vmatpush.msra.mxu0 %v502
        %530 = vmatpush.msra.mxu0 %v501
        %531 = vmatpush.msra.mxu0 %v500
        %532 = vmatmul.f32.gmra.mxu0 %v373
        %v533 = vpop.f32.mrf.mxu0
        %v534 = vadd.f32 0.0, %v533
        %535 = vmatmul.f32.gmra.mxu0 %v376
        %v536 = vpop.f32.mrf.mxu0
        %v537 = vadd.f32 0.0, %v536
        %538 = vmatmul.f32.gmra.mxu0 %v379
        %v539 = vpop.f32.mrf.mxu0
        %v540 = vadd.f32 0.0, %v539
        %541 = vmatmul.f32.gmra.mxu0 %v382
        %v542 = vpop.f32.mrf.mxu0
        %v543 = vadd.f32 0.0, %v542
        %544 = vmatmul.f32.gmra.mxu0 %v385
        %v545 = vpop.f32.mrf.mxu0
        %v546 = vadd.f32 0.0, %v545
        %547 = vmatmul.f32.gmra.mxu0 %v388
        %v548 = vpop.f32.mrf.mxu0
        %v549 = vadd.f32 0.0, %v548
        %550 = vmatmul.f32.gmra.mxu0 %v391
        %v551 = vpop.f32.mrf.mxu0
        %v552 = vadd.f32 0.0, %v551
        %553 = vmatmul.f32.gmra.mxu0 %v394
        %v554 = vpop.f32.mrf.mxu0
        %v555 = vadd.f32 0.0, %v554
        %556 = vmatmul.f32.gmra.mxu0 %v397
        %v557 = vpop.f32.mrf.mxu0
        %v558 = vadd.f32 0.0, %v557
        %559 = vmatmul.f32.gmra.mxu0 %v400
        %v560 = vpop.f32.mrf.mxu0
        %v561 = vadd.f32 0.0, %v560
        %562 = vmatmul.f32.gmra.mxu0 %v403
        %v563 = vpop.f32.mrf.mxu0
        %v564 = vadd.f32 0.0, %v563
        %565 = vmatmul.f32.gmra.mxu0 %v406
        %v566 = vpop.f32.mrf.mxu0
        %v567 = vadd.f32 0.0, %v566
        %568 = vmatmul.f32.gmra.mxu0 %v409
        %v569 = vpop.f32.mrf.mxu0
        %v570 = vadd.f32 0.0, %v569
        %571 = vmatmul.f32.gmra.mxu0 %v412
        %v572 = vpop.f32.mrf.mxu0
        %v573 = vadd.f32 0.0, %v572
        %574 = vmatmul.f32.gmra.mxu0 %v415
        %v575 = vpop.f32.mrf.mxu0
        %v576 = vadd.f32 0.0, %v575
        %577 = vmatmul.f32.gmra.mxu0 %v418
        %v578 = vpop.f32.mrf.mxu0
        %v579 = vadd.f32 0.0, %v578
        %580 = vmatmul.f32.gmra.mxu0 %v421
        %v581 = vpop.f32.mrf.mxu0
        %v582 = vadd.f32 0.0, %v581
        %583 = vmatmul.f32.gmra.mxu0 %v424
        %v584 = vpop.f32.mrf.mxu0
        %v585 = vadd.f32 0.0, %v584
        %586 = vmatmul.f32.gmra.mxu0 %v427
        %v587 = vpop.f32.mrf.mxu0
        %v588 = vadd.f32 0.0, %v587
        %589 = vmatmul.f32.gmra.mxu0 %v430
        %v590 = vpop.f32.mrf.mxu0
        %v591 = vadd.f32 0.0, %v590
        %592 = vmatmul.f32.gmra.mxu0 %v433
        %v593 = vpop.f32.mrf.mxu0
        %v594 = vadd.f32 0.0, %v593
        %595 = vmatmul.f32.gmra.mxu0 %v436
        %v596 = vpop.f32.mrf.mxu0
        %v597 = vadd.f32 0.0, %v596
        %598 = vmatmul.f32.gmra.mxu0 %v439
        %v599 = vpop.f32.mrf.mxu0
        %v600 = vadd.f32 0.0, %v599
        %601 = vmatmul.f32.gmra.mxu0 %v442
        %v602 = vpop.f32.mrf.mxu0
        %v603 = vadd.f32 0.0, %v602
        %604 = vmatmul.f32.gmra.mxu0 %v445
        %v605 = vpop.f32.mrf.mxu0
        %v606 = vadd.f32 0.0, %v605
        %607 = vmatmul.f32.gmra.mxu0 %v448
        %v608 = vpop.f32.mrf.mxu0
        %v609 = vadd.f32 0.0, %v608
        %610 = vmatmul.f32.gmra.mxu0 %v451
        %v611 = vpop.f32.mrf.mxu0
        %v612 = vadd.f32 0.0, %v611
        %613 = vmatmul.f32.gmra.mxu0 %v454
        %v614 = vpop.f32.mrf.mxu0
        %v615 = vadd.f32 0.0, %v614
        %616 = vmatmul.f32.gmra.mxu0 %v457
        %v617 = vpop.f32.mrf.mxu0
        %v618 = vadd.f32 0.0, %v617
        %619 = vmatmul.f32.gmra.mxu0 %v460
        %v620 = vpop.f32.mrf.mxu0
        %v621 = vadd.f32 0.0, %v620
        %622 = vmatmul.f32.gmra.mxu0 %v463
        %v623 = vpop.f32.mrf.mxu0
        %v624 = vadd.f32 0.0, %v623
        %625 = vmatmul.f32.gmra.mxu0 %v466
        %v626 = vpop.f32.mrf.mxu0
        %v627 = vadd.f32 0.0, %v626
        %628 = vdwg.mxu0
        %vm629 = vcmask 15360
        %630 = vst.msk [vmem:[%s211] sm:$0xff] %vm629, %v534
        %631 = vst.msk [vmem:[%s211 + $0x8] sm:$0xff] %vm629, %v537
        %632 = vst.msk [vmem:[%s211 + $0x10] sm:$0xff] %vm629, %v540
        %633 = vst.msk [vmem:[%s211 + $0x18] sm:$0xff] %vm629, %v543
        %634 = vst.msk [vmem:[%s211 + $0x20] sm:$0xff] %vm629, %v546
        %635 = vst.msk [vmem:[%s211 + $0x28] sm:$0xff] %vm629, %v549
        %636 = vst.msk [vmem:[%s211 + $0x30] sm:$0xff] %vm629, %v552
        %637 = vst.msk [vmem:[%s211 + $0x38] sm:$0xff] %vm629, %v555
        %638 = vst.msk [vmem:[%s211 + $0x40] sm:$0xff] %vm629, %v558
        %639 = vst.msk [vmem:[%s211 + $0x48] sm:$0xff] %vm629, %v561
        %640 = vst.msk [vmem:[%s211 + $0x50] sm:$0xff] %vm629, %v564
        %641 = vst.msk [vmem:[%s211 + $0x58] sm:$0xff] %vm629, %v567
        %642 = vst.msk [vmem:[%s211 + $0x60] sm:$0xff] %vm629, %v570
        %643 = vst.msk [vmem:[%s211 + $0x68] sm:$0xff] %vm629, %v573
        %644 = vst.msk [vmem:[%s211 + $0x70] sm:$0xff] %vm629, %v576
        %645 = vst.msk [vmem:[%s211 + $0x78] sm:$0xff] %vm629, %v579
        %646 = vst.msk [vmem:[%s211 + $0x80] sm:$0xff] %vm629, %v582
        %647 = vst.msk [vmem:[%s211 + $0x88] sm:$0xff] %vm629, %v585
        %648 = vst.msk [vmem:[%s211 + $0x90] sm:$0xff] %vm629, %v588
        %649 = vst.msk [vmem:[%s211 + $0x98] sm:$0xff] %vm629, %v591
        %650 = vst.msk [vmem:[%s211 + $0xa0] sm:$0xff] %vm629, %v594
        %651 = vst.msk [vmem:[%s211 + $0xa8] sm:$0xff] %vm629, %v597
        %652 = vst.msk [vmem:[%s211 + $0xb0] sm:$0xff] %vm629, %v600
        %653 = vst.msk [vmem:[%s211 + $0xb8] sm:$0xff] %vm629, %v603
        %654 = vst.msk [vmem:[%s211 + $0xc0] sm:$0xff] %vm629, %v606
        %655 = vst.msk [vmem:[%s211 + $0xc8] sm:$0xff] %vm629, %v609
        %656 = vst.msk [vmem:[%s211 + $0xd0] sm:$0xff] %vm629, %v612
        %657 = vst.msk [vmem:[%s211 + $0xd8] sm:$0xff] %vm629, %v615
        %658 = vst.msk [vmem:[%s211 + $0xe0] sm:$0xff] %vm629, %v618
        %659 = vst.msk [vmem:[%s211 + $0xe8] sm:$0xff] %vm629, %v621
        %660 = vst.msk [vmem:[%s211 + $0xf0] sm:$0xff] %vm629, %v624
        %661 = vst.msk [vmem:[%s211 + $0xf8] sm:$0xff] %vm629, %v627
        %s662 = sand.u32 %s95, 1
        %s663 = scalar_lea.sflag [#allocation3], %s662
        %s664 = sand.u32 %s95, 1
        %s665 = smul.addr %s664, 256
        %s666 = scalar_lea.vmem [#allocation2], %s665
        %s667 = smul.u32 32, %s19
        %p668 = scmp.lt.s32.totalorder %s667, 63
        %s669 = scalar_select %p668, %s667, 63
        %s670 = smul.addr %s669, 8
        %s671 = scalar_lea.vmem %s4, %s670
        // Predicated region
        $region33: #{tpu_custom_call.1} parent=31 // pred_check
          %p672 = pneg %p105
        $region34: #{tpu_custom_call.1} parent=31 // pred_check_branch
          %674 = sbr.rel (%p672) target = $region36
        $region35: #{tpu_custom_call.1} parent=31 // pred_region
          %s675 = smul.u32 32, %s19
          %677 = vsyncadd %s663, 0
          %s678 = smul.addr %s675, 8
          %s679 = scalar_lea.hbm %s3, %s678
          %s680 = sshll.u32 %s666, 4
          %s681 = int_to_ptr.vmem [resolvable:$true] %s680
          %s682 = sshll.u32 %s679, 4
          %s683 = int_to_ptr.hbm [resolvable:$true] %s682
          %688 = dma.vmem_to_hbm [thread:$0]  %s681, 4096, %s683, %s663, 128, 128, 8
        $region36: #{tpu_custom_call.1} parent=31 // pred_fallthru
          _
        // Predicated region
        $region37: #{tpu_custom_call.1} parent=31 // pred_check
          %p689 = pneg %p131
        $region38: #{tpu_custom_call.1} parent=31 // pred_check_branch
          %691 = sbr.rel (%p689) target = $region40
        $region39: #{tpu_custom_call.1} parent=31 // pred_region
          %s692 = smul.u32 32, %s19
        $region40: #{tpu_custom_call.1} parent=31 // pred_fallthru
          _
      $region32: #{tpu_custom_call.1} parent=5 // pred_fallthru
        _
      %p693 = scmp.le.s32.totalorder 2, %s14
      // Predicated region
      $region41: #{tpu_custom_call.1} parent=5 // pred_check
        %p694 = pneg %p693
      $region42: #{tpu_custom_call.1} parent=5 // pred_check_branch
        %696 = sbr.rel (%p694) target = $region44
      $region43: #{tpu_custom_call.1} parent=5 // pred_region
        %s697 = ssub.s32 %s14, 2
        // Predicated region
        $region45: #{tpu_custom_call.1} parent=43 // pred_check
          %p698 = pneg %p111
        $region46: #{tpu_custom_call.1} parent=43 // pred_check_branch
          %700 = sbr.rel (%p698) target = $region48
        $region47: #{tpu_custom_call.1} parent=43 // pred_region
          %s701 = sand.u32 %s96, 1
          %s702 = scalar_lea.sflag [#allocation3], %s701
          %s703 = sand.u32 %s96, 1
          %s704 = smul.addr %s703, 256
          %s705 = scalar_lea.vmem [#allocation2], %s704
          %707 = dma.done %s702, 4096
        $region48: #{tpu_custom_call.1} parent=43 // pred_fallthru
          _
        // Predicated region
        $region49: #{tpu_custom_call.1} parent=43 // pred_check
          %p708 = pneg %p137
        $region50: #{tpu_custom_call.1} parent=43 // pred_check_branch
          %710 = sbr.rel (%p708) target = $region52
        $region51: #{tpu_custom_call.1} parent=43 // pred_region
          %s711 = smul.u32 32, %s20
          %p712 = scmp.lt.s32.totalorder %s711, 63
          %s713 = scalar_select %p712, %s711, 63
          %s714 = smul.addr %s713, 8
          %s715 = scalar_lea.vmem %s4, %s714
        $region52: #{tpu_custom_call.1} parent=43 // pred_fallthru
          _
      $region44: #{tpu_custom_call.1} parent=5 // pred_fallthru
        _
    $region6: #{tpu_custom_call.1} parent=1 // loop_footer
      %s18 = sadd.s32 1, %s14
    $region7: #{tpu_custom_call.1} parent=1 // loop_footer_branch
      %13 = sbr.rel target = $region3
    $region8: #{tpu_custom_call.1} parent=1 // loop_exit
      _
    %716 = vsyncpa [#allocation3], 1
    %s717 = scalar_lea.sflag [#allocation3], 1
    %718 = vsyncpa %s717, 1

</llo_original>
